<compile_context>
chip_gen: v5e
topology: v5e:2x2
jax: 0.10.0
libtpu: 0.0.40
codegen_flags: <defaults>
</compile_context>

<pallas_src>
import numpy as np
import jax
import jax.numpy as jnp
from jax.experimental import pallas as pl
from jax.experimental.pallas import tpu as pltpu

L_IN = 256          # conv input length: three valid k=5 convs -> 256 - 12 = 244 = fc1 in_features
K = 5               # Conv1d kernel size
N_CONV = 3
FC1_IN = 244
HIDDEN = 256        # TODO(synk): original CNN1_Net declares fc2 with num_hidden=1024, which is
                    # shape-incompatible with fc1's 256-dim output; we use 256 so the forward runs.
AVG_P = 1.0
PEAK = None         # NIT(peak=None) -> PeakConstraint (clip to [-peak, peak]) not applied
MAX_TB = 1024       # batch tile (rows); big enough to amortize ~0.35us/step, small enough for v7x VMEM


def _round_up(x, m):
    return (x + m - 1) // m * m


def _band_matrices(cw):
    """(N_CONV, 256, 256) banded matmul equivalents of the three valid k=5 Conv1d layers.

    out[:, i] = sum_j cw[l, j] * h[:, i + j]  for i < lout_l;  columns >= lout_l are zero,
    so garbage in a layer's padded tail is killed by the next layer's zero band rows
    (and by the zero rows [244:256) of W1 for the last conv layer).
    """
    mats = []
    for l in range(N_CONV):
        lout = L_IN - (l + 1) * (K - 1)              # 252, 248, 244
        j = np.arange(K)[:, None]                    # tap index
        i = np.arange(lout)[None, :]                 # output position
        rows = (i + j).reshape(-1)
        cols = np.broadcast_to(i, (K, lout)).reshape(-1)
        vals = jnp.broadcast_to(cw[l][:, None], (K, lout)).reshape(-1)
        m = jnp.zeros((L_IN, L_IN), jnp.float32).at[rows, cols].set(vals)
        mats.append(m)
    return jnp.stack(mats)


def _nit_kernel(x_ref, wband_ref, cb_ref,
                w1_ref, b1_ref, w2_ref, b2_ref, w3_ref, b3_ref,
                w4_ref, b4_ref, o_ref):
    h = x_ref[...]                                   # (TB, 256) f32, one batch tile

    # --- CNN1_Net.classifier: 3x (Conv1d(1,1,5, valid) + ReLU) as banded MXU matmuls
    for layer in range(N_CONV):
        h = jnp.maximum(
            jnp.dot(h, wband_ref[layer], preferred_element_type=jnp.float32)
            + cb_ref[layer], 0.0)                    # stays lane-dense at width 256

    # --- fc1: Linear(244,256)+ReLU (+Dropout(0.5) == identity in eval)  (W1 rows 244: are zero)
    h = jnp.maximum(
        jnp.dot(h, w1_ref[...], preferred_element_type=jnp.float32) + b1_ref[...], 0.0)
    # --- fc2: Linear+ReLU, Linear+ReLU
    h = jnp.maximum(
        jnp.dot(h, w2_ref[...], preferred_element_type=jnp.float32) + b2_ref[...], 0.0)
    h = jnp.maximum(
        jnp.dot(h, w3_ref[...], preferred_element_type=jnp.float32) + b3_ref[...], 0.0)

    # --- final Linear(256 -> 1) as VPU mul + XLU lane reduce (no N=1 MXU pass)
    out = jnp.sum(h * w4_ref[...], axis=-1, keepdims=True) + b4_ref[0]   # (TB, 1) unnormalized
    o_ref[...] = out.astype(o_ref.dtype)


def nit_forward(x_ncl, p):
    """x_ncl: (B, 1, 256) float32 (PyTorch NCL conv layout). Returns (B, 1, 1)."""
    x = x_ncl[:, 0, :].astype(jnp.float32)           # squeeze channel -> (B, 256)
    B = x.shape[0]
    TB = min(MAX_TB, _round_up(B, 8))
    B_pad = _round_up(B, TB)
    if B_pad != B:
        x = jnp.concatenate([x, jnp.zeros((B_pad - B, L_IN), x.dtype)], axis=0)
    num_tiles = B_pad // TB

    def resident(shape):                              # full array, DMA'd once, stays in VMEM
        return pl.BlockSpec(shape, lambda i, _s=shape: (0,) * len(_s))

    smem = pl.BlockSpec(memory_space=pltpu.MemorySpace.SMEM)

    flops = 2 * B_pad * L_IN * L_IN * (N_CONV + 3) + 2 * B_pad * HIDDEN
    bytes_accessed = 4 * (x.size + p["wband"].size + p["w1"].size + p["w2"].size
                          + p["w3"].size + p["w4"].size + 3 * HIDDEN + N_CONV + 1 + B_pad)

    out = pl.pallas_call(
        _nit_kernel,
        out_shape=jax.ShapeDtypeStruct((B_pad, 1), jnp.float32),
        grid=(num_tiles,),
        in_specs=[
            pl.BlockSpec((TB, L_IN), lambda i: (i, 0)),   # x tile (auto double-buffered)
            resident((N_CONV, L_IN, L_IN)),               # banded conv weights
            smem,                                         # conv biases (3,)
            resident((L_IN, HIDDEN)), resident((1, HIDDEN)),      # w1 (rows 244: zero), b1
            resident((HIDDEN, HIDDEN)), resident((1, HIDDEN)),    # w2, b2
            resident((HIDDEN, HIDDEN)), resident((1, HIDDEN)),    # w3, b3
            resident((1, HIDDEN)),                        # w4 row (PyTorch (out,in) layout)
            smem,                                         # b4 (1,)
        ],
        out_specs=pl.BlockSpec((TB, 1), lambda i: (i, 0)),
        compiler_params=pltpu.CompilerParams(dimension_semantics=("parallel",)),
        cost_estimate=pl.CostEstimate(flops=flops, transcendentals=0,
                                      bytes_accessed=bytes_accessed),
    )(x, p["wband"], p["cb"], p["w1"], p["b1"], p["w2"], p["b2"],
      p["w3"], p["b3"], p["w4"], p["b4"])

    # --- NIT epilogue (tiny, plain JAX): norm = unnorm / sqrt(mean(unnorm^2)) * sqrt(avg_P)
    un = out[:B]                                      # drop padded rows before the global mean
    norm = un / jnp.sqrt(jnp.mean(un * un)) * jnp.float32(np.sqrt(AVG_P))
    if PEAK is not None:
        norm = jnp.clip(norm, -PEAK, PEAK)            # PeakConstraint == clamp to [-peak, peak]
    return norm[:, None, :]                           # (B, 1, 1), like the PyTorch module


def init_params(key):
    ks = jax.random.split(key, 9)

    def u(k, shape, fan_in):
        bound = 1.0 / np.sqrt(fan_in)
        return jax.random.uniform(k, shape, jnp.float32, -bound, bound)

    cw = u(ks[0], (N_CONV, K), K)                    # 3 conv filters, each (1,1,5) -> (5,)
    cb = u(ks[1], (N_CONV,), K)
    w1_valid = u(ks[2], (FC1_IN, HIDDEN), FC1_IN)    # Linear(244, 256), pre-transposed
    w1 = jnp.zeros((L_IN, HIDDEN), jnp.float32).at[:FC1_IN].set(w1_valid)
    b1 = u(ks[3], (1, HIDDEN), FC1_IN)
    w2 = u(ks[4], (HIDDEN, HIDDEN), HIDDEN)
    b2 = u(ks[5], (1, HIDDEN), HIDDEN)
    w3 = u(ks[6], (HIDDEN, HIDDEN), HIDDEN)
    b3 = u(ks[7], (1, HIDDEN), HIDDEN)
    w4 = u(ks[8], (1, HIDDEN), HIDDEN)               # Linear(256,1) weight, PyTorch (out,in) layout
    b4 = jnp.array([0.1], jnp.float32)               # deterministic, nonzero (avoids 0/0 in norm)
    wband = _band_matrices(cw)                       # conv layers as banded matmul weights
    return dict(cw=cw, cb=cb, wband=wband, w1=w1, b1=b1, w2=w2, b2=b2,
                w3=w3, b3=b3, w4=w4, b4=b4)


def nit_reference(x_ncl, p):
    """Pure-JAX reference mirroring the PyTorch forward (eval mode)."""
    h = x_ncl[:, 0, :]
    for layer in range(N_CONV):
        lout = h.shape[1] - (K - 1)
        acc = sum(p["cw"][layer, j] * h[:, j:j + lout] for j in range(K))
        h = jnp.maximum(acc + p["cb"][layer], 0.0)
    h = jnp.maximum(h @ p["w1"][:FC1_IN] + p["b1"], 0.0)
    h = jnp.maximum(h @ p["w2"] + p["b2"], 0.0)
    h = jnp.maximum(h @ p["w3"] + p["b3"], 0.0)
    out = h @ p["w4"].T + p["b4"]
    norm = out / jnp.sqrt(jnp.mean(out ** 2)) * jnp.sqrt(AVG_P)
    if PEAK is not None:
        norm = jnp.clip(norm, -PEAK, PEAK)
    return norm[:, None, :]


if __name__ == "__main__":
    key = jax.random.PRNGKey(0)
    kx, kp = jax.random.split(key)
    B = 8
    x = jax.random.normal(kx, (B, 1, L_IN), jnp.float32)   # NCL conv input, C=1
    params = init_params(kp)

    y = jax.block_until_ready(nit_forward(x, params))
    y_ref = np.asarray(nit_reference(x, params))

    assert y.shape == (B, 1, 1)
    np.testing.assert_allclose(np.asarray(y), y_ref, rtol=1e-3, atol=1e-4)
    print("KERNEL_OK")
</pallas_src>

<mosaic_0001>
module attributes {stable_mosaic.version = 11 : i64} {
  func.func @_nit_kernel(%arg0: i32, %arg1: memref<8x256xf32, #tpu.memory_space<vmem>>, %arg2: memref<3x256x256xf32, #tpu.memory_space<vmem>>, %arg3: memref<3xf32, #tpu.memory_space<smem>>, %arg4: memref<256x256xf32, #tpu.memory_space<vmem>>, %arg5: memref<1x256xf32, #tpu.memory_space<vmem>>, %arg6: memref<256x256xf32, #tpu.memory_space<vmem>>, %arg7: memref<1x256xf32, #tpu.memory_space<vmem>>, %arg8: memref<256x256xf32, #tpu.memory_space<vmem>>, %arg9: memref<1x256xf32, #tpu.memory_space<vmem>>, %arg10: memref<1x256xf32, #tpu.memory_space<vmem>>, %arg11: memref<1xf32, #tpu.memory_space<smem>>, %arg12: memref<8x1xf32, #tpu.memory_space<vmem>>) attributes {dimension_semantics = [#tpu.dimension_semantics<parallel>], iteration_bounds = array<i64: 1>, scalar_prefetch = 0 : i64, scratch_operands = 0 : i64, tpu.core_type = #tpu.core_type<tc>, window_params = [{transform_indices = @transform_0, window_bounds = array<i64: 8, 256>}, {pipeline_mode = #tpu.pipeline_mode<synchronous>, transform_indices = @transform_1, window_bounds = array<i64: 3, 256, 256>}, {transform_indices = @transform_2, window_bounds = array<i64: 3>}, {pipeline_mode = #tpu.pipeline_mode<synchronous>, transform_indices = @transform_3, window_bounds = array<i64: 256, 256>}, {pipeline_mode = #tpu.pipeline_mode<synchronous>, transform_indices = @transform_4, window_bounds = array<i64: 1, 256>}, {pipeline_mode = #tpu.pipeline_mode<synchronous>, transform_indices = @transform_5, window_bounds = array<i64: 256, 256>}, {pipeline_mode = #tpu.pipeline_mode<synchronous>, transform_indices = @transform_6, window_bounds = array<i64: 1, 256>}, {pipeline_mode = #tpu.pipeline_mode<synchronous>, transform_indices = @transform_7, window_bounds = array<i64: 256, 256>}, {pipeline_mode = #tpu.pipeline_mode<synchronous>, transform_indices = @transform_8, window_bounds = array<i64: 1, 256>}, {pipeline_mode = #tpu.pipeline_mode<synchronous>, transform_indices = @transform_9, window_bounds = array<i64: 1, 256>}, {transform_indices = @transform_10, window_bounds = array<i64: 1>}, {transform_indices = @transform_11, window_bounds = array<i64: 8, 1>}]} {
    %c0 = arith.constant 0 : index
    %c0_0 = arith.constant 0 : index
    %0 = vector.load %arg1[%c0, %c0_0] : memref<8x256xf32, #tpu.memory_space<vmem>>, vector<8x256xf32>
    %c0_1 = arith.constant 0 : index
    %c0_2 = arith.constant 0 : index
    %c0_3 = arith.constant 0 : index
    %1 = vector.load %arg2[%c0_1, %c0_2, %c0_3] : memref<3x256x256xf32, #tpu.memory_space<vmem>>, vector<1x256x256xf32>
    %2 = vector.shape_cast %1 : vector<1x256x256xf32> to vector<256x256xf32>
    %cst = arith.constant dense<0.000000e+00> : vector<8x256xf32>
    %3 = tpu.matmul %0, %2, %cst {dimension_numbers = #tpu.dot_dimension_numbers<[1], [0], [0], [1], [0, 0, 1, 1], [], []>} : vector<8x256xf32>, vector<256x256xf32>, vector<8x256xf32> -> vector<8x256xf32>
    %c0_4 = arith.constant 0 : index
    %4 = memref.load %arg3[%c0_4] : memref<3xf32, #tpu.memory_space<smem>>
    %5 = vector.broadcast %4 : f32 to vector<8x256xf32>
    %6 = arith.addf %3, %5 : vector<8x256xf32>
    %cst_5 = arith.constant 0.000000e+00 : f32
    %7 = vector.broadcast %cst_5 : f32 to vector<8x256xf32>
    %8 = arith.maximumf %6, %7 : vector<8x256xf32>
    %c1 = arith.constant 1 : index
    %c0_6 = arith.constant 0 : index
    %c0_7 = arith.constant 0 : index
    %9 = vector.load %arg2[%c1, %c0_6, %c0_7] : memref<3x256x256xf32, #tpu.memory_space<vmem>>, vector<1x256x256xf32>
    %10 = vector.shape_cast %9 : vector<1x256x256xf32> to vector<256x256xf32>
    %cst_8 = arith.constant dense<0.000000e+00> : vector<8x256xf32>
    %11 = tpu.matmul %8, %10, %cst_8 {dimension_numbers = #tpu.dot_dimension_numbers<[1], [0], [0], [1], [0, 0, 1, 1], [], []>} : vector<8x256xf32>, vector<256x256xf32>, vector<8x256xf32> -> vector<8x256xf32>
    %c1_9 = arith.constant 1 : index
    %12 = memref.load %arg3[%c1_9] : memref<3xf32, #tpu.memory_space<smem>>
    %13 = vector.broadcast %12 : f32 to vector<8x256xf32>
    %14 = arith.addf %11, %13 : vector<8x256xf32>
    %cst_10 = arith.constant 0.000000e+00 : f32
    %15 = vector.broadcast %cst_10 : f32 to vector<8x256xf32>
    %16 = arith.maximumf %14, %15 : vector<8x256xf32>
    %c2 = arith.constant 2 : index
    %c0_11 = arith.constant 0 : index
    %c0_12 = arith.constant 0 : index
    %17 = vector.load %arg2[%c2, %c0_11, %c0_12] : memref<3x256x256xf32, #tpu.memory_space<vmem>>, vector<1x256x256xf32>
    %18 = vector.shape_cast %17 : vector<1x256x256xf32> to vector<256x256xf32>
    %cst_13 = arith.constant dense<0.000000e+00> : vector<8x256xf32>
    %19 = tpu.matmul %16, %18, %cst_13 {dimension_numbers = #tpu.dot_dimension_numbers<[1], [0], [0], [1], [0, 0, 1, 1], [], []>} : vector<8x256xf32>, vector<256x256xf32>, vector<8x256xf32> -> vector<8x256xf32>
    %c2_14 = arith.constant 2 : index
    %20 = memref.load %arg3[%c2_14] : memref<3xf32, #tpu.memory_space<smem>>
    %21 = vector.broadcast %20 : f32 to vector<8x256xf32>
    %22 = arith.addf %19, %21 : vector<8x256xf32>
    %cst_15 = arith.constant 0.000000e+00 : f32
    %23 = vector.broadcast %cst_15 : f32 to vector<8x256xf32>
    %24 = arith.maximumf %22, %23 : vector<8x256xf32>
    %c0_16 = arith.constant 0 : index
    %c0_17 = arith.constant 0 : index
    %25 = vector.load %arg4[%c0_16, %c0_17] : memref<256x256xf32, #tpu.memory_space<vmem>>, vector<256x256xf32>
    %cst_18 = arith.constant dense<0.000000e+00> : vector<8x256xf32>
    %26 = tpu.matmul %24, %25, %cst_18 {dimension_numbers = #tpu.dot_dimension_numbers<[1], [0], [0], [1], [0, 0, 1, 1], [], []>} : vector<8x256xf32>, vector<256x256xf32>, vector<8x256xf32> -> vector<8x256xf32>
    %c0_19 = arith.constant 0 : index
    %c0_20 = arith.constant 0 : index
    %27 = vector.load %arg5[%c0_19, %c0_20] : memref<1x256xf32, #tpu.memory_space<vmem>>, vector<1x256xf32>
    %28 = vector.broadcast %27 : vector<1x256xf32> to vector<8x256xf32>
    %29 = arith.addf %26, %28 : vector<8x256xf32>
    %cst_21 = arith.constant 0.000000e+00 : f32
    %30 = vector.broadcast %cst_21 : f32 to vector<8x256xf32>
    %31 = arith.maximumf %29, %30 : vector<8x256xf32>
    %c0_22 = arith.constant 0 : index
    %c0_23 = arith.constant 0 : index
    %32 = vector.load %arg6[%c0_22, %c0_23] : memref<256x256xf32, #tpu.memory_space<vmem>>, vector<256x256xf32>
    %cst_24 = arith.constant dense<0.000000e+00> : vector<8x256xf32>
    %33 = tpu.matmul %31, %32, %cst_24 {dimension_numbers = #tpu.dot_dimension_numbers<[1], [0], [0], [1], [0, 0, 1, 1], [], []>} : vector<8x256xf32>, vector<256x256xf32>, vector<8x256xf32> -> vector<8x256xf32>
    %c0_25 = arith.constant 0 : index
    %c0_26 = arith.constant 0 : index
    %34 = vector.load %arg7[%c0_25, %c0_26] : memref<1x256xf32, #tpu.memory_space<vmem>>, vector<1x256xf32>
    %35 = vector.broadcast %34 : vector<1x256xf32> to vector<8x256xf32>
    %36 = arith.addf %33, %35 : vector<8x256xf32>
    %cst_27 = arith.constant 0.000000e+00 : f32
    %37 = vector.broadcast %cst_27 : f32 to vector<8x256xf32>
    %38 = arith.maximumf %36, %37 : vector<8x256xf32>
    %c0_28 = arith.constant 0 : index
    %c0_29 = arith.constant 0 : index
    %39 = vector.load %arg8[%c0_28, %c0_29] : memref<256x256xf32, #tpu.memory_space<vmem>>, vector<256x256xf32>
    %cst_30 = arith.constant dense<0.000000e+00> : vector<8x256xf32>
    %40 = tpu.matmul %38, %39, %cst_30 {dimension_numbers = #tpu.dot_dimension_numbers<[1], [0], [0], [1], [0, 0, 1, 1], [], []>} : vector<8x256xf32>, vector<256x256xf32>, vector<8x256xf32> -> vector<8x256xf32>
    %c0_31 = arith.constant 0 : index
    %c0_32 = arith.constant 0 : index
    %41 = vector.load %arg9[%c0_31, %c0_32] : memref<1x256xf32, #tpu.memory_space<vmem>>, vector<1x256xf32>
    %42 = vector.broadcast %41 : vector<1x256xf32> to vector<8x256xf32>
    %43 = arith.addf %40, %42 : vector<8x256xf32>
    %cst_33 = arith.constant 0.000000e+00 : f32
    %44 = vector.broadcast %cst_33 : f32 to vector<8x256xf32>
    %45 = arith.maximumf %43, %44 : vector<8x256xf32>
    %c0_34 = arith.constant 0 : index
    %c0_35 = arith.constant 0 : index
    %46 = vector.load %arg10[%c0_34, %c0_35] : memref<1x256xf32, #tpu.memory_space<vmem>>, vector<1x256xf32>
    %47 = vector.broadcast %46 : vector<1x256xf32> to vector<8x256xf32>
    %48 = arith.mulf %45, %47 : vector<8x256xf32>
    %cst_36 = arith.constant dense<0.000000e+00> : vector<8xf32>
    %49 = vector.multi_reduction <add>, %48, %cst_36 [1] : vector<8x256xf32> to vector<8xf32>
    %50 = vector.shape_cast %49 : vector<8xf32> to vector<8x1xf32>
    %c0_37 = arith.constant 0 : index
    %51 = memref.load %arg11[%c0_37] : memref<1xf32, #tpu.memory_space<smem>>
    %52 = vector.broadcast %51 : f32 to vector<8x1xf32>
    %53 = arith.addf %50, %52 : vector<8x1xf32>
    %c0_38 = arith.constant 0 : index
    %c0_39 = arith.constant 0 : index
    %54 = vector.load %arg12[%c0_38, %c0_39] : memref<8x1xf32, #tpu.memory_space<vmem>>, vector<8x1xf32>
    tpu.vector_store %arg12[%c0_38, %c0_39], %53 {strides = array<i32>} : memref<8x1xf32, #tpu.memory_space<vmem>>, vector<8x1xf32>,
    return
  }
  func.func @transform_0(%arg0: i32) -> (i32, i32) {
    %c0_i32 = arith.constant 0 : i32
    %c0_i32_0 = arith.constant 0 : i32
    return %arg0, %c0_i32 : i32, i32
  }
  func.func @transform_1(%arg0: i32) -> (i32, i32, i32) {
    %c0_i32 = arith.constant 0 : i32
    %c0_i32_0 = arith.constant 0 : i32
    %c0_i32_1 = arith.constant 0 : i32
    %c0_i32_2 = arith.constant 0 : i32
    return %c0_i32, %c0_i32_0, %c0_i32_1 : i32, i32, i32
  }
  func.func @transform_2(%arg0: i32) -> i32 {
    %c0_i32 = arith.constant 0 : i32
    %c0_i32_0 = arith.constant 0 : i32
    return %c0_i32 : i32
  }
  func.func @transform_3(%arg0: i32) -> (i32, i32) {
    %c0_i32 = arith.constant 0 : i32
    %c0_i32_0 = arith.constant 0 : i32
    %c0_i32_1 = arith.constant 0 : i32
    return %c0_i32, %c0_i32_0 : i32, i32
  }
  func.func @transform_4(%arg0: i32) -> (i32, i32) {
    %c0_i32 = arith.constant 0 : i32
    %c0_i32_0 = arith.constant 0 : i32
    %c0_i32_1 = arith.constant 0 : i32
    return %c0_i32, %c0_i32_0 : i32, i32
  }
  func.func @transform_5(%arg0: i32) -> (i32, i32) {
    %c0_i32 = arith.constant 0 : i32
    %c0_i32_0 = arith.constant 0 : i32
    %c0_i32_1 = arith.constant 0 : i32
    return %c0_i32, %c0_i32_0 : i32, i32
  }
  func.func @transform_6(%arg0: i32) -> (i32, i32) {
    %c0_i32 = arith.constant 0 : i32
    %c0_i32_0 = arith.constant 0 : i32
    %c0_i32_1 = arith.constant 0 : i32
    return %c0_i32, %c0_i32_0 : i32, i32
  }
  func.func @transform_7(%arg0: i32) -> (i32, i32) {
    %c0_i32 = arith.constant 0 : i32
    %c0_i32_0 = arith.constant 0 : i32
    %c0_i32_1 = arith.constant 0 : i32
    return %c0_i32, %c0_i32_0 : i32, i32
  }
  func.func @transform_8(%arg0: i32) -> (i32, i32) {
    %c0_i32 = arith.constant 0 : i32
    %c0_i32_0 = arith.constant 0 : i32
    %c0_i32_1 = arith.constant 0 : i32
    return %c0_i32, %c0_i32_0 : i32, i32
  }
  func.func @transform_9(%arg0: i32) -> (i32, i32) {
    %c0_i32 = arith.constant 0 : i32
    %c0_i32_0 = arith.constant 0 : i32
    %c0_i32_1 = arith.constant 0 : i32
    return %c0_i32, %c0_i32_0 : i32, i32
  }
  func.func @transform_10(%arg0: i32) -> i32 {
    %c0_i32 = arith.constant 0 : i32
    %c0_i32_0 = arith.constant 0 : i32
    return %c0_i32 : i32
  }
  func.func @transform_11(%arg0: i32) -> (i32, i32) {
    %c0_i32 = arith.constant 0 : i32
    %c0_i32_0 = arith.constant 0 : i32
    return %arg0, %c0_i32 : i32, i32
  }
}

</mosaic_0001>

<llo_original>
// kernel: tpu_custom_call.1
$region0: #{tpu_custom_call.1}
  #allocation0 [shape = 'u32[]', space=smem, size = 0x4, offset = 0x4, fixed_abs, tag = 'smem constant byte address 0x4 - core index']
  #allocation1 [shape = 'u32[72,128]{1,0:T(1,128)}', space=vmem, size = 0x9000, scoped, tag = 'internal scratch']
  #allocation2 [shape = 'f32[1]{0:T(128)S(6)}', space=smem, size = 0x200, scoped, tag = 'scoped memory for tpu_custom_call.1']
  %s0 = inlined_call_operand.hbm [shape: f32[8,256], index: 0, kind: input, shape index: {}]
  %s1 = inlined_call_operand.hbm [shape: f32[3,256,256], index: 1, kind: input, shape index: {}]
  %s2 = inlined_call_operand.hbm [shape: f32[3], index: 2, kind: input, shape index: {}]
  %s3 = inlined_call_operand.hbm [shape: f32[256,256], index: 3, kind: input, shape index: {}]
  %s4 = inlined_call_operand.vmem [shape: f32[1,256], index: 4, kind: input, shape index: {}]
  %s5 = inlined_call_operand.hbm [shape: f32[256,256], index: 5, kind: input, shape index: {}]
  %s6 = inlined_call_operand.vmem [shape: f32[1,256], index: 6, kind: input, shape index: {}]
  %s7 = inlined_call_operand.hbm [shape: f32[256,256], index: 7, kind: input, shape index: {}]
  %s8 = inlined_call_operand.vmem [shape: f32[1,256], index: 8, kind: input, shape index: {}]
  %s9 = inlined_call_operand.vmem [shape: f32[1,256], index: 9, kind: input, shape index: {}]
  %s10 = inlined_call_operand.<no memory space> [shape: f32[1], index: 10, kind: input, shape index: {}]
  %s11 = inlined_call_operand.vmem [shape: f32[8,1], index: 11, kind: output, shape index: {}]
  %s12 = sld [smem:[#allocation0]]
  $region78: #{tpu_custom_call.1} parent=0
    _
  %s14 = ssub.s32 1, %s12
  %s15 = scalar_select 0, %s14, %s12
  %16 = sst [smem:[#allocation2]] %s10
  $region1: #{tpu_custom_call.1} parent=0
    #allocation3 [shape = 'u8[8192]{0}', space=vmem, size = 0x2000, scoped, tag = 'input window, operand 0, single buffered']
    #allocation4 [shape = 's32[1]{0}', space=sflag, size = 0x4, scoped, tag = 'scoped memory for tpu_custom_call.1']
    #allocation5 [shape = 's32[1]{0}', space=sflag, size = 0x4, scoped, tag = 'scoped memory for tpu_custom_call.1']
    #allocation6 [shape = 'u8[786432]{0}', space=vmem, size = 0xc0000, scoped, tag = 'input window, operand 1, single buffered']
    #allocation7 [shape = 's32[1]{0}', space=sflag, size = 0x4, scoped, tag = 'scoped memory for tpu_custom_call.1']
    #allocation8 [shape = 'u8[512]{0}', space=smem, size = 0x200, scoped, tag = 'input window, operand 2, single buffered']
    #allocation9 [shape = 'u8[262144]{0}', space=vmem, size = 0x40000, scoped, tag = 'input window, operand 3, single buffered']
    #allocation10 [shape = 'u8[262144]{0}', space=vmem, size = 0x40000, scoped, tag = 'input window, operand 5, single buffered']
    #allocation11 [shape = 's32[1]{0}', space=sflag, size = 0x4, scoped, tag = 'scoped memory for tpu_custom_call.1']
    #allocation12 [shape = 'u8[262144]{0}', space=vmem, size = 0x40000, scoped, tag = 'input window, operand 7, single buffered']
    %17 = vsyncpa [#allocation4], 0
    %18 = vsyncpa [#allocation7], 0
    %19 = vsyncpa [#allocation5], 0
    %20 = vsyncpa [#allocation11], 0
    // Predicated region
    $region2: #{tpu_custom_call.1} parent=1 // pred_check
      _
    $region3: #{tpu_custom_call.1} parent=1 // pred_check_branch
      %22 = sbr.rel (0) target = $region5
    $region4: #{tpu_custom_call.1} parent=1 // pred_region
      %24 = vsyncadd [#allocation4], 0
      %s26 = sshll.u32 %s0, 4
      %s27 = int_to_ptr.hbm [resolvable:$true] %s26
      %s28 = sshll.u32 [#allocation3], 4
      %s29 = int_to_ptr.vmem [resolvable:$true] %s28
      %31 = dma.hbm_to_vmem [thread:$0]  %s27, 256, %s29, [#allocation4]
    $region5: #{tpu_custom_call.1} parent=1 // pred_fallthru
      _
    // Predicated region
    $region6: #{tpu_custom_call.1} parent=1 // pred_check
      _
    $region7: #{tpu_custom_call.1} parent=1 // pred_check_branch
      %33 = sbr.rel (0) target = $region9
    $region8: #{tpu_custom_call.1} parent=1 // pred_region
      %35 = vsyncadd [#allocation7], 0
      %s36 = sshll.u32 %s1, 4
      %s37 = int_to_ptr.hbm [resolvable:$true] %s36
      %s38 = sshll.u32 [#allocation6], 4
      %s39 = int_to_ptr.vmem [resolvable:$true] %s38
      %44 = dma.hbm_to_vmem [thread:$0]  %s37, 24576, %s39, [#allocation7], 256, 256, 16
    $region9: #{tpu_custom_call.1} parent=1 // pred_fallthru
      _
    // Predicated region
    $region10: #{tpu_custom_call.1} parent=1 // pred_check
      _
    $region11: #{tpu_custom_call.1} parent=1 // pred_check_branch
      %46 = sbr.rel (0) target = $region13
    $region12: #{tpu_custom_call.1} parent=1 // pred_region
      %48 = vsyncadd [#allocation5], 0
      %s50 = sshll.u32 %s2, 4
      %s51 = int_to_ptr.hbm [resolvable:$true] %s50
      %53 = dma.hbm_to_smem %s51, 16, [#allocation8], [#allocation5]
    $region13: #{tpu_custom_call.1} parent=1 // pred_fallthru
      _
    // Predicated region
    $region14: #{tpu_custom_call.1} parent=1 // pred_check
      _
    $region15: #{tpu_custom_call.1} parent=1 // pred_check_branch
      %55 = sbr.rel (0) target = $region17
    $region16: #{tpu_custom_call.1} parent=1 // pred_region
      %57 = vsyncadd [#allocation7], 0
      %s58 = sshll.u32 %s3, 4
      %s59 = int_to_ptr.hbm [resolvable:$true] %s58
      %s60 = sshll.u32 [#allocation9], 4
      %s61 = int_to_ptr.vmem [resolvable:$true] %s60
      %66 = dma.hbm_to_vmem [thread:$0]  %s59, 8192, %s61, [#allocation7], 256, 256, 16
    $region17: #{tpu_custom_call.1} parent=1 // pred_fallthru
      _
    // Predicated region
    $region18: #{tpu_custom_call.1} parent=1 // pred_check
      _
    $region19: #{tpu_custom_call.1} parent=1 // pred_check_branch
      %68 = sbr.rel (0) target = $region21
    $region20: #{tpu_custom_call.1} parent=1 // pred_region
      _
    $region21: #{tpu_custom_call.1} parent=1 // pred_fallthru
      _
    // Predicated region
    $region22: #{tpu_custom_call.1} parent=1 // pred_check
      _
    $region23: #{tpu_custom_call.1} parent=1 // pred_check_branch
      %70 = sbr.rel (0) target = $region25
    $region24: #{tpu_custom_call.1} parent=1 // pred_region
      %72 = vsyncadd [#allocation11], 0
      %s73 = sshll.u32 %s5, 4
      %s74 = int_to_ptr.hbm [resolvable:$true] %s73
      %s75 = sshll.u32 [#allocation10], 4
      %s76 = int_to_ptr.vmem [resolvable:$true] %s75
      %81 = dma.hbm_to_vmem [thread:$0]  %s74, 8192, %s76, [#allocation11], 256, 256, 16
    $region25: #{tpu_custom_call.1} parent=1 // pred_fallthru
      _
    // Predicated region
    $region26: #{tpu_custom_call.1} parent=1 // pred_check
      _
    $region27: #{tpu_custom_call.1} parent=1 // pred_check_branch
      %83 = sbr.rel (0) target = $region29
    $region28: #{tpu_custom_call.1} parent=1 // pred_region
      _
    $region29: #{tpu_custom_call.1} parent=1 // pred_fallthru
      _
    // Predicated region
    $region30: #{tpu_custom_call.1} parent=1 // pred_check
      _
    $region31: #{tpu_custom_call.1} parent=1 // pred_check_branch
      %85 = sbr.rel (0) target = $region33
    $region32: #{tpu_custom_call.1} parent=1 // pred_region
      %87 = vsyncadd [#allocation11], 0
      %s88 = sshll.u32 %s7, 4
      %s89 = int_to_ptr.hbm [resolvable:$true] %s88
      %s90 = sshll.u32 [#allocation12], 4
      %s91 = int_to_ptr.vmem [resolvable:$true] %s90
      %96 = dma.hbm_to_vmem [thread:$0]  %s89, 8192, %s91, [#allocation11], 256, 256, 16
    $region33: #{tpu_custom_call.1} parent=1 // pred_fallthru
      _
    // Predicated region
    $region34: #{tpu_custom_call.1} parent=1 // pred_check
      _
    $region35: #{tpu_custom_call.1} parent=1 // pred_check_branch
      %98 = sbr.rel (0) target = $region37
    $region36: #{tpu_custom_call.1} parent=1 // pred_region
      _
    $region37: #{tpu_custom_call.1} parent=1 // pred_fallthru
      _
    // Predicated region
    $region38: #{tpu_custom_call.1} parent=1 // pred_check
      _
    $region39: #{tpu_custom_call.1} parent=1 // pred_check_branch
      %100 = sbr.rel (0) target = $region41
    $region40: #{tpu_custom_call.1} parent=1 // pred_region
      _
    $region41: #{tpu_custom_call.1} parent=1 // pred_fallthru
      _
    // Predicated region
    $region42: #{tpu_custom_call.1} parent=1 // pred_check
      _
    $region43: #{tpu_custom_call.1} parent=1 // pred_check_branch
      %102 = sbr.rel (0) target = $region45
    $region44: #{tpu_custom_call.1} parent=1 // pred_region
      _
    $region45: #{tpu_custom_call.1} parent=1 // pred_fallthru
      _
    // Predicated region
    $region46: #{tpu_custom_call.1} parent=1 // pred_check
      _
    $region47: #{tpu_custom_call.1} parent=1 // pred_check_branch
      %104 = sbr.rel (0) target = $region49
    $region48: #{tpu_custom_call.1} parent=1 // pred_region
      %106 = dma.done [#allocation4], 256
    $region49: #{tpu_custom_call.1} parent=1 // pred_fallthru
      _
    // Predicated region
    $region50: #{tpu_custom_call.1} parent=1 // pred_check
      _
    $region51: #{tpu_custom_call.1} parent=1 // pred_check_branch
      %108 = sbr.rel (0) target = $region53
    $region52: #{tpu_custom_call.1} parent=1 // pred_region
      %110 = dma.done [#allocation7], 24576
    $region53: #{tpu_custom_call.1} parent=1 // pred_fallthru
      _
    // Predicated region
    $region54: #{tpu_custom_call.1} parent=1 // pred_check
      _
    $region55: #{tpu_custom_call.1} parent=1 // pred_check_branch
      %112 = sbr.rel (0) target = $region57
    $region56: #{tpu_custom_call.1} parent=1 // pred_region
      %114 = dma.done [#allocation5], 16
    $region57: #{tpu_custom_call.1} parent=1 // pred_fallthru
      _
    // Predicated region
    $region58: #{tpu_custom_call.1} parent=1 // pred_check
      _
    $region59: #{tpu_custom_call.1} parent=1 // pred_check_branch
      %116 = sbr.rel (0) target = $region61
    $region60: #{tpu_custom_call.1} parent=1 // pred_region
      %118 = dma.done [#allocation7], 8192
    $region61: #{tpu_custom_call.1} parent=1 // pred_fallthru
      _
    // Predicated region
    $region62: #{tpu_custom_call.1} parent=1 // pred_check
      _
    $region63: #{tpu_custom_call.1} parent=1 // pred_check_branch
      %120 = sbr.rel (0) target = $region65
    $region64: #{tpu_custom_call.1} parent=1 // pred_region
      %122 = dma.done [#allocation11], 8192
    $region65: #{tpu_custom_call.1} parent=1 // pred_fallthru
      _
    // Predicated region
    $region66: #{tpu_custom_call.1} parent=1 // pred_check
      _
    $region67: #{tpu_custom_call.1} parent=1 // pred_check_branch
      %124 = sbr.rel (0) target = $region69
    $region68: #{tpu_custom_call.1} parent=1 // pred_region
      %126 = dma.done [#allocation11], 8192
    $region69: #{tpu_custom_call.1} parent=1 // pred_fallthru
      _
    %127 = sfence
    %v128 = vld [vmem:[#allocation3] sm:$0xff]
    %v129 = vld [vmem:[#allocation3 + $0x8] sm:$0xff]
    %v130 = vld [vmem:[#allocation6] sm:$0xff]
    %v131 = vld [vmem:[#allocation6 + $0x8] sm:$0xff]
    %v132 = vld [vmem:[#allocation6 + $0x10] sm:$0xff]
    %v133 = vld [vmem:[#allocation6 + $0x18] sm:$0xff]
    %v134 = vld [vmem:[#allocation6 + $0x20] sm:$0xff]
    %v135 = vld [vmem:[#allocation6 + $0x28] sm:$0xff]
    %v136 = vld [vmem:[#allocation6 + $0x30] sm:$0xff]
    %v137 = vld [vmem:[#allocation6 + $0x38] sm:$0xff]
    %v138 = vld [vmem:[#allocation6 + $0x40] sm:$0xff]
    %v139 = vld [vmem:[#allocation6 + $0x48] sm:$0xff]
    %v140 = vld [vmem:[#allocation6 + $0x50] sm:$0xff]
    %v141 = vld [vmem:[#allocation6 + $0x58] sm:$0xff]
    %v142 = vld [vmem:[#allocation6 + $0x60] sm:$0xff]
    %v143 = vld [vmem:[#allocation6 + $0x68] sm:$0xff]
    %v144 = vld [vmem:[#allocation6 + $0x70] sm:$0xff]
    %v145 = vld [vmem:[#allocation6 + $0x78] sm:$0xff]
    %v146 = vld [vmem:[#allocation6 + $0x80] sm:$0xff]
    %v147 = vld [vmem:[#allocation6 + $0x88] sm:$0xff]
    %v148 = vld [vmem:[#allocation6 + $0x90] sm:$0xff]
    %v149 = vld [vmem:[#allocation6 + $0x98] sm:$0xff]
    %v150 = vld [vmem:[#allocation6 + $0xa0] sm:$0xff]
    %v151 = vld [vmem:[#allocation6 + $0xa8] sm:$0xff]
    %v152 = vld [vmem:[#allocation6 + $0xb0] sm:$0xff]
    %v153 = vld [vmem:[#allocation6 + $0xb8] sm:$0xff]
    %v154 = vld [vmem:[#allocation6 + $0xc0] sm:$0xff]
    %v155 = vld [vmem:[#allocation6 + $0xc8] sm:$0xff]
    %v156 = vld [vmem:[#allocation6 + $0xd0] sm:$0xff]
    %v157 = vld [vmem:[#allocation6 + $0xd8] sm:$0xff]
    %v158 = vld [vmem:[#allocation6 + $0xe0] sm:$0xff]
    %v159 = vld [vmem:[#allocation6 + $0xe8] sm:$0xff]
    %v160 = vld [vmem:[#allocation6 + $0xf0] sm:$0xff]
    %v161 = vld [vmem:[#allocation6 + $0xf8] sm:$0xff]
    %v162 = vld [vmem:[#allocation6 + $0x100] sm:$0xff]
    %v163 = vld [vmem:[#allocation6 + $0x108] sm:$0xff]
    %v164 = vld [vmem:[#allocation6 + $0x110] sm:$0xff]
    %v165 = vld [vmem:[#allocation6 + $0x118] sm:$0xff]
    %v166 = vld [vmem:[#allocation6 + $0x120] sm:$0xff]
    %v167 = vld [vmem:[#allocation6 + $0x128] sm:$0xff]
    %v168 = vld [vmem:[#allocation6 + $0x130] sm:$0xff]
    %v169 = vld [vmem:[#allocation6 + $0x138] sm:$0xff]
    %v170 = vld [vmem:[#allocation6 + $0x140] sm:$0xff]
    %v171 = vld [vmem:[#allocation6 + $0x148] sm:$0xff]
    %v172 = vld [vmem:[#allocation6 + $0x150] sm:$0xff]
    %v173 = vld [vmem:[#allocation6 + $0x158] sm:$0xff]
    %v174 = vld [vmem:[#allocation6 + $0x160] sm:$0xff]
    %v175 = vld [vmem:[#allocation6 + $0x168] sm:$0xff]
    %v176 = vld [vmem:[#allocation6 + $0x170] sm:$0xff]
    %v177 = vld [vmem:[#allocation6 + $0x178] sm:$0xff]
    %v178 = vld [vmem:[#allocation6 + $0x180] sm:$0xff]
    %v179 = vld [vmem:[#allocation6 + $0x188] sm:$0xff]
    %v180 = vld [vmem:[#allocation6 + $0x190] sm:$0xff]
    %v181 = vld [vmem:[#allocation6 + $0x198] sm:$0xff]
    %v182 = vld [vmem:[#allocation6 + $0x1a0] sm:$0xff]
    %v183 = vld [vmem:[#allocation6 + $0x1a8] sm:$0xff]
    %v184 = vld [vmem:[#allocation6 + $0x1b0] sm:$0xff]
    %v185 = vld [vmem:[#allocation6 + $0x1b8] sm:$0xff]
    %v186 = vld [vmem:[#allocation6 + $0x1c0] sm:$0xff]
    %v187 = vld [vmem:[#allocation6 + $0x1c8] sm:$0xff]
    %v188 = vld [vmem:[#allocation6 + $0x1d0] sm:$0xff]
    %v189 = vld [vmem:[#allocation6 + $0x1d8] sm:$0xff]
    %v190 = vld [vmem:[#allocation6 + $0x1e0] sm:$0xff]
    %v191 = vld [vmem:[#allocation6 + $0x1e8] sm:$0xff]
    %v192 = vld [vmem:[#allocation6 + $0x1f0] sm:$0xff]
    %v193 = vld [vmem:[#allocation6 + $0x1f8] sm:$0xff]
    %s194 = sld [smem:[#allocation8]]
    %v195 = vstv %s194
    %196 = vmatpush.msra.mxu0 %v160
    %197 = vmatpush.msra.mxu0 %v158
    %198 = vmatpush.msra.mxu0 %v156
    %199 = vmatpush.msra.mxu0 %v154
    %200 = vmatpush.msra.mxu0 %v152
    %201 = vmatpush.msra.mxu0 %v150
    %202 = vmatpush.msra.mxu0 %v148
    %203 = vmatpush.msra.mxu0 %v146
    %204 = vmatpush.msra.mxu0 %v144
    %205 = vmatpush.msra.mxu0 %v142
    %206 = vmatpush.msra.mxu0 %v140
    %207 = vmatpush.msra.mxu0 %v138
    %208 = vmatpush.msra.mxu0 %v136
    %209 = vmatpush.msra.mxu0 %v134
    %210 = vmatpush.msra.mxu0 %v132
    %211 = vmatpush.msra.mxu0 %v130
    %212 = vmatmul.f32.gmra.mxu0 %v128
    %v213 = vpop.f32.mrf.mxu0
    %v214 = vadd.f32 %v195, %v213
    %215 = vdwg.mxu0
    %216 = vmatpush.msra.mxu0 %v192
    %217 = vmatpush.msra.mxu0 %v190
    %218 = vmatpush.msra.mxu0 %v188
    %219 = vmatpush.msra.mxu0 %v186
    %220 = vmatpush.msra.mxu0 %v184
    %221 = vmatpush.msra.mxu0 %v182
    %222 = vmatpush.msra.mxu0 %v180
    %223 = vmatpush.msra.mxu0 %v178
    %224 = vmatpush.msra.mxu0 %v176
    %225 = vmatpush.msra.mxu0 %v174
    %226 = vmatpush.msra.mxu0 %v172
    %227 = vmatpush.msra.mxu0 %v170
    %228 = vmatpush.msra.mxu0 %v168
    %229 = vmatpush.msra.mxu0 %v166
    %230 = vmatpush.msra.mxu0 %v164
    %231 = vmatpush.msra.mxu0 %v162
    %232 = vmatmul.f32.gmra.mxu0 %v129
    %v233 = vpop.f32.mrf.mxu0
    %v234 = vadd.f32 %v214, %v233
    %235 = vdwg.mxu0
    %236 = vmatpush.msra.mxu0 %v161
    %237 = vmatpush.msra.mxu0 %v159
    %238 = vmatpush.msra.mxu0 %v157
    %239 = vmatpush.msra.mxu0 %v155
    %240 = vmatpush.msra.mxu0 %v153
    %241 = vmatpush.msra.mxu0 %v151
    %242 = vmatpush.msra.mxu0 %v149
    %243 = vmatpush.msra.mxu0 %v147
    %244 = vmatpush.msra.mxu0 %v145
    %245 = vmatpush.msra.mxu0 %v143
    %246 = vmatpush.msra.mxu0 %v141
    %247 = vmatpush.msra.mxu0 %v139
    %248 = vmatpush.msra.mxu0 %v137
    %249 = vmatpush.msra.mxu0 %v135
    %250 = vmatpush.msra.mxu0 %v133
    %251 = vmatpush.msra.mxu0 %v131
    %252 = vmatmul.f32.gmra.mxu0 %v128
    %v253 = vpop.f32.mrf.mxu0
    %v254 = vadd.f32 %v195, %v253
    %255 = vdwg.mxu0
    %256 = vmatpush.msra.mxu0 %v193
    %257 = vmatpush.msra.mxu0 %v191
    %258 = vmatpush.msra.mxu0 %v189
    %259 = vmatpush.msra.mxu0 %v187
    %260 = vmatpush.msra.mxu0 %v185
    %261 = vmatpush.msra.mxu0 %v183
    %262 = vmatpush.msra.mxu0 %v181
    %263 = vmatpush.msra.mxu0 %v179
    %264 = vmatpush.msra.mxu0 %v177
    %265 = vmatpush.msra.mxu0 %v175
    %266 = vmatpush.msra.mxu0 %v173
    %267 = vmatpush.msra.mxu0 %v171
    %268 = vmatpush.msra.mxu0 %v169
    %269 = vmatpush.msra.mxu0 %v167
    %270 = vmatpush.msra.mxu0 %v165
    %271 = vmatpush.msra.mxu0 %v163
    %272 = vmatmul.f32.gmra.mxu0 %v129
    %v273 = vpop.f32.mrf.mxu0
    %v274 = vadd.f32 %v254, %v273
    %275 = vdwg.mxu0
    %v276 = vmax.f32 %v234, 0.0
    %v277 = vmax.f32 %v274, 0.0
    %s278 = scalar_lea.vmem [#allocation6], 512
    %v279 = vld [vmem:[%s278] sm:$0xff]
    %v280 = vld [vmem:[%s278 + $0x8] sm:$0xff]
    %v281 = vld [vmem:[%s278 + $0x10] sm:$0xff]
    %v282 = vld [vmem:[%s278 + $0x18] sm:$0xff]
    %v283 = vld [vmem:[%s278 + $0x20] sm:$0xff]
    %v284 = vld [vmem:[%s278 + $0x28] sm:$0xff]
    %v285 = vld [vmem:[%s278 + $0x30] sm:$0xff]
    %v286 = vld [vmem:[%s278 + $0x38] sm:$0xff]
    %v287 = vld [vmem:[%s278 + $0x40] sm:$0xff]
    %v288 = vld [vmem:[%s278 + $0x48] sm:$0xff]
    %v289 = vld [vmem:[%s278 + $0x50] sm:$0xff]
    %v290 = vld [vmem:[%s278 + $0x58] sm:$0xff]
    %v291 = vld [vmem:[%s278 + $0x60] sm:$0xff]
    %v292 = vld [vmem:[%s278 + $0x68] sm:$0xff]
    %v293 = vld [vmem:[%s278 + $0x70] sm:$0xff]
    %v294 = vld [vmem:[%s278 + $0x78] sm:$0xff]
    %v295 = vld [vmem:[%s278 + $0x80] sm:$0xff]
    %v296 = vld [vmem:[%s278 + $0x88] sm:$0xff]
    %v297 = vld [vmem:[%s278 + $0x90] sm:$0xff]
    %v298 = vld [vmem:[%s278 + $0x98] sm:$0xff]
    %v299 = vld [vmem:[%s278 + $0xa0] sm:$0xff]
    %v300 = vld [vmem:[%s278 + $0xa8] sm:$0xff]
    %v301 = vld [vmem:[%s278 + $0xb0] sm:$0xff]
    %v302 = vld [vmem:[%s278 + $0xb8] sm:$0xff]
    %v303 = vld [vmem:[%s278 + $0xc0] sm:$0xff]
    %v304 = vld [vmem:[%s278 + $0xc8] sm:$0xff]
    %v305 = vld [vmem:[%s278 + $0xd0] sm:$0xff]
    %v306 = vld [vmem:[%s278 + $0xd8] sm:$0xff]
    %v307 = vld [vmem:[%s278 + $0xe0] sm:$0xff]
    %v308 = vld [vmem:[%s278 + $0xe8] sm:$0xff]
    %v309 = vld [vmem:[%s278 + $0xf0] sm:$0xff]
    %v310 = vld [vmem:[%s278 + $0xf8] sm:$0xff]
    %v311 = vld [vmem:[%s278 + $0x100] sm:$0xff]
    %v312 = vld [vmem:[%s278 + $0x108] sm:$0xff]
    %v313 = vld [vmem:[%s278 + $0x110] sm:$0xff]
    %v314 = vld [vmem:[%s278 + $0x118] sm:$0xff]
    %v315 = vld [vmem:[%s278 + $0x120] sm:$0xff]
    %v316 = vld [vmem:[%s278 + $0x128] sm:$0xff]
    %v317 = vld [vmem:[%s278 + $0x130] sm:$0xff]
    %v318 = vld [vmem:[%s278 + $0x138] sm:$0xff]
    %v319 = vld [vmem:[%s278 + $0x140] sm:$0xff]
    %v320 = vld [vmem:[%s278 + $0x148] sm:$0xff]
    %v321 = vld [vmem:[%s278 + $0x150] sm:$0xff]
    %v322 = vld [vmem:[%s278 + $0x158] sm:$0xff]
    %v323 = vld [vmem:[%s278 + $0x160] sm:$0xff]
    %v324 = vld [vmem:[%s278 + $0x168] sm:$0xff]
    %v325 = vld [vmem:[%s278 + $0x170] sm:$0xff]
    %v326 = vld [vmem:[%s278 + $0x178] sm:$0xff]
    %v327 = vld [vmem:[%s278 + $0x180] sm:$0xff]
    %v328 = vld [vmem:[%s278 + $0x188] sm:$0xff]
    %v329 = vld [vmem:[%s278 + $0x190] sm:$0xff]
    %v330 = vld [vmem:[%s278 + $0x198] sm:$0xff]
    %v331 = vld [vmem:[%s278 + $0x1a0] sm:$0xff]
    %v332 = vld [vmem:[%s278 + $0x1a8] sm:$0xff]
    %v333 = vld [vmem:[%s278 + $0x1b0] sm:$0xff]
    %v334 = vld [vmem:[%s278 + $0x1b8] sm:$0xff]
    %v335 = vld [vmem:[%s278 + $0x1c0] sm:$0xff]
    %v336 = vld [vmem:[%s278 + $0x1c8] sm:$0xff]
    %v337 = vld [vmem:[%s278 + $0x1d0] sm:$0xff]
    %v338 = vld [vmem:[%s278 + $0x1d8] sm:$0xff]
    %v339 = vld [vmem:[%s278 + $0x1e0] sm:$0xff]
    %v340 = vld [vmem:[%s278 + $0x1e8] sm:$0xff]
    %v341 = vld [vmem:[%s278 + $0x1f0] sm:$0xff]
    %v342 = vld [vmem:[%s278 + $0x1f8] sm:$0xff]
    %s343 = sld [smem:[#allocation8 + $0x1]]
    %v344 = vstv %s343
    %345 = vmatpush.msra.mxu0 %v309
    %346 = vmatpush.msra.mxu0 %v307
    %347 = vmatpush.msra.mxu0 %v305
    %348 = vmatpush.msra.mxu0 %v303
    %349 = vmatpush.msra.mxu0 %v301
    %350 = vmatpush.msra.mxu0 %v299
    %351 = vmatpush.msra.mxu0 %v297
    %352 = vmatpush.msra.mxu0 %v295
    %353 = vmatpush.msra.mxu0 %v293
    %354 = vmatpush.msra.mxu0 %v291
    %355 = vmatpush.msra.mxu0 %v289
    %356 = vmatpush.msra.mxu0 %v287
    %357 = vmatpush.msra.mxu0 %v285
    %358 = vmatpush.msra.mxu0 %v283
    %359 = vmatpush.msra.mxu0 %v281
    %360 = vmatpush.msra.mxu0 %v279
    %361 = vmatmul.f32.gmra.mxu0 %v276
    %v362 = vpop.f32.mrf.mxu0
    %v363 = vadd.f32 %v344, %v362
    %364 = vdwg.mxu0
    %365 = vmatpush.msra.mxu0 %v341
    %366 = vmatpush.msra.mxu0 %v339
    %367 = vmatpush.msra.mxu0 %v337
    %368 = vmatpush.msra.mxu0 %v335
    %369 = vmatpush.msra.mxu0 %v333
    %370 = vmatpush.msra.mxu0 %v331
    %371 = vmatpush.msra.mxu0 %v329
    %372 = vmatpush.msra.mxu0 %v327
    %373 = vmatpush.msra.mxu0 %v325
    %374 = vmatpush.msra.mxu0 %v323
    %375 = vmatpush.msra.mxu0 %v321
    %376 = vmatpush.msra.mxu0 %v319
    %377 = vmatpush.msra.mxu0 %v317
    %378 = vmatpush.msra.mxu0 %v315
    %379 = vmatpush.msra.mxu0 %v313
    %380 = vmatpush.msra.mxu0 %v311
    %381 = vmatmul.f32.gmra.mxu0 %v277
    %v382 = vpop.f32.mrf.mxu0
    %v383 = vadd.f32 %v363, %v382
    %384 = vdwg.mxu0
    %385 = vmatpush.msra.mxu0 %v310
    %386 = vmatpush.msra.mxu0 %v308
    %387 = vmatpush.msra.mxu0 %v306
    %388 = vmatpush.msra.mxu0 %v304
    %389 = vmatpush.msra.mxu0 %v302
    %390 = vmatpush.msra.mxu0 %v300
    %391 = vmatpush.msra.mxu0 %v298
    %392 = vmatpush.msra.mxu0 %v296
    %393 = vmatpush.msra.mxu0 %v294
    %394 = vmatpush.msra.mxu0 %v292
    %395 = vmatpush.msra.mxu0 %v290
    %396 = vmatpush.msra.mxu0 %v288
    %397 = vmatpush.msra.mxu0 %v286
    %398 = vmatpush.msra.mxu0 %v284
    %399 = vmatpush.msra.mxu0 %v282
    %400 = vmatpush.msra.mxu0 %v280
    %401 = vmatmul.f32.gmra.mxu0 %v276
    %v402 = vpop.f32.mrf.mxu0
    %v403 = vadd.f32 %v344, %v402
    %404 = vdwg.mxu0
    %405 = vmatpush.msra.mxu0 %v342
    %406 = vmatpush.msra.mxu0 %v340
    %407 = vmatpush.msra.mxu0 %v338
    %408 = vmatpush.msra.mxu0 %v336
    %409 = vmatpush.msra.mxu0 %v334
    %410 = vmatpush.msra.mxu0 %v332
    %411 = vmatpush.msra.mxu0 %v330
    %412 = vmatpush.msra.mxu0 %v328
    %413 = vmatpush.msra.mxu0 %v326
    %414 = vmatpush.msra.mxu0 %v324
    %415 = vmatpush.msra.mxu0 %v322
    %416 = vmatpush.msra.mxu0 %v320
    %417 = vmatpush.msra.mxu0 %v318
    %418 = vmatpush.msra.mxu0 %v316
    %419 = vmatpush.msra.mxu0 %v314
    %420 = vmatpush.msra.mxu0 %v312
    %421 = vmatmul.f32.gmra.mxu0 %v277
    %v422 = vpop.f32.mrf.mxu0
    %v423 = vadd.f32 %v403, %v422
    %424 = vdwg.mxu0
    %v425 = vmax.f32 %v383, 0.0
    %v426 = vmax.f32 %v423, 0.0
    %s427 = scalar_lea.vmem [#allocation6], 1024
    %v428 = vld [vmem:[%s427] sm:$0xff]
    %v429 = vld [vmem:[%s427 + $0x8] sm:$0xff]
    %v430 = vld [vmem:[%s427 + $0x10] sm:$0xff]
    %v431 = vld [vmem:[%s427 + $0x18] sm:$0xff]
    %v432 = vld [vmem:[%s427 + $0x20] sm:$0xff]
    %v433 = vld [vmem:[%s427 + $0x28] sm:$0xff]
    %v434 = vld [vmem:[%s427 + $0x30] sm:$0xff]
    %v435 = vld [vmem:[%s427 + $0x38] sm:$0xff]
    %v436 = vld [vmem:[%s427 + $0x40] sm:$0xff]
    %v437 = vld [vmem:[%s427 + $0x48] sm:$0xff]
    %v438 = vld [vmem:[%s427 + $0x50] sm:$0xff]
    %v439 = vld [vmem:[%s427 + $0x58] sm:$0xff]
    %v440 = vld [vmem:[%s427 + $0x60] sm:$0xff]
    %v441 = vld [vmem:[%s427 + $0x68] sm:$0xff]
    %v442 = vld [vmem:[%s427 + $0x70] sm:$0xff]
    %v443 = vld [vmem:[%s427 + $0x78] sm:$0xff]
    %v444 = vld [vmem:[%s427 + $0x80] sm:$0xff]
    %v445 = vld [vmem:[%s427 + $0x88] sm:$0xff]
    %v446 = vld [vmem:[%s427 + $0x90] sm:$0xff]
    %v447 = vld [vmem:[%s427 + $0x98] sm:$0xff]
    %v448 = vld [vmem:[%s427 + $0xa0] sm:$0xff]
    %v449 = vld [vmem:[%s427 + $0xa8] sm:$0xff]
    %v450 = vld [vmem:[%s427 + $0xb0] sm:$0xff]
    %v451 = vld [vmem:[%s427 + $0xb8] sm:$0xff]
    %v452 = vld [vmem:[%s427 + $0xc0] sm:$0xff]
    %v453 = vld [vmem:[%s427 + $0xc8] sm:$0xff]
    %v454 = vld [vmem:[%s427 + $0xd0] sm:$0xff]
    %v455 = vld [vmem:[%s427 + $0xd8] sm:$0xff]
    %v456 = vld [vmem:[%s427 + $0xe0] sm:$0xff]
    %v457 = vld [vmem:[%s427 + $0xe8] sm:$0xff]
    %v458 = vld [vmem:[%s427 + $0xf0] sm:$0xff]
    %v459 = vld [vmem:[%s427 + $0xf8] sm:$0xff]
    %v460 = vld [vmem:[%s427 + $0x100] sm:$0xff]
    %v461 = vld [vmem:[%s427 + $0x108] sm:$0xff]
    %v462 = vld [vmem:[%s427 + $0x110] sm:$0xff]
    %v463 = vld [vmem:[%s427 + $0x118] sm:$0xff]
    %v464 = vld [vmem:[%s427 + $0x120] sm:$0xff]
    %v465 = vld [vmem:[%s427 + $0x128] sm:$0xff]
    %v466 = vld [vmem:[%s427 + $0x130] sm:$0xff]
    %v467 = vld [vmem:[%s427 + $0x138] sm:$0xff]
    %v468 = vld [vmem:[%s427 + $0x140] sm:$0xff]
    %v469 = vld [vmem:[%s427 + $0x148] sm:$0xff]
    %v470 = vld [vmem:[%s427 + $0x150] sm:$0xff]
    %v471 = vld [vmem:[%s427 + $0x158] sm:$0xff]
    %v472 = vld [vmem:[%s427 + $0x160] sm:$0xff]
    %v473 = vld [vmem:[%s427 + $0x168] sm:$0xff]
    %v474 = vld [vmem:[%s427 + $0x170] sm:$0xff]
    %v475 = vld [vmem:[%s427 + $0x178] sm:$0xff]
    %v476 = vld [vmem:[%s427 + $0x180] sm:$0xff]
    %v477 = vld [vmem:[%s427 + $0x188] sm:$0xff]
    %v478 = vld [vmem:[%s427 + $0x190] sm:$0xff]
    %v479 = vld [vmem:[%s427 + $0x198] sm:$0xff]
    %v480 = vld [vmem:[%s427 + $0x1a0] sm:$0xff]
    %v481 = vld [vmem:[%s427 + $0x1a8] sm:$0xff]
    %v482 = vld [vmem:[%s427 + $0x1b0] sm:$0xff]
    %v483 = vld [vmem:[%s427 + $0x1b8] sm:$0xff]
    %v484 = vld [vmem:[%s427 + $0x1c0] sm:$0xff]
    %v485 = vld [vmem:[%s427 + $0x1c8] sm:$0xff]
    %v486 = vld [vmem:[%s427 + $0x1d0] sm:$0xff]
    %v487 = vld [vmem:[%s427 + $0x1d8] sm:$0xff]
    %v488 = vld [vmem:[%s427 + $0x1e0] sm:$0xff]
    %v489 = vld [vmem:[%s427 + $0x1e8] sm:$0xff]
    %v490 = vld [vmem:[%s427 + $0x1f0] sm:$0xff]
    %v491 = vld [vmem:[%s427 + $0x1f8] sm:$0xff]
    %s492 = sld [smem:[#allocation8 + $0x2]]
    %v493 = vstv %s492
    %494 = vmatpush.msra.mxu0 %v458
    %495 = vmatpush.msra.mxu0 %v456
    %496 = vmatpush.msra.mxu0 %v454
    %497 = vmatpush.msra.mxu0 %v452
    %498 = vmatpush.msra.mxu0 %v450
    %499 = vmatpush.msra.mxu0 %v448
    %500 = vmatpush.msra.mxu0 %v446
    %501 = vmatpush.msra.mxu0 %v444
    %502 = vmatpush.msra.mxu0 %v442
    %503 = vmatpush.msra.mxu0 %v440
    %504 = vmatpush.msra.mxu0 %v438
    %505 = vmatpush.msra.mxu0 %v436
    %506 = vmatpush.msra.mxu0 %v434
    %507 = vmatpush.msra.mxu0 %v432
    %508 = vmatpush.msra.mxu0 %v430
    %509 = vmatpush.msra.mxu0 %v428
    %510 = vmatmul.f32.gmra.mxu0 %v425
    %v511 = vpop.f32.mrf.mxu0
    %v512 = vadd.f32 %v493, %v511
    %513 = vdwg.mxu0
    %514 = vmatpush.msra.mxu0 %v490
    %515 = vmatpush.msra.mxu0 %v488
    %516 = vmatpush.msra.mxu0 %v486
    %517 = vmatpush.msra.mxu0 %v484
    %518 = vmatpush.msra.mxu0 %v482
    %519 = vmatpush.msra.mxu0 %v480
    %520 = vmatpush.msra.mxu0 %v478
    %521 = vmatpush.msra.mxu0 %v476
    %522 = vmatpush.msra.mxu0 %v474
    %523 = vmatpush.msra.mxu0 %v472
    %524 = vmatpush.msra.mxu0 %v470
    %525 = vmatpush.msra.mxu0 %v468
    %526 = vmatpush.msra.mxu0 %v466
    %527 = vmatpush.msra.mxu0 %v464
    %528 = vmatpush.msra.mxu0 %v462
    %529 = vmatpush.msra.mxu0 %v460
    %530 = vmatmul.f32.gmra.mxu0 %v426
    %v531 = vpop.f32.mrf.mxu0
    %v532 = vadd.f32 %v512, %v531
    %533 = vdwg.mxu0
    %534 = vmatpush.msra.mxu0 %v459
    %535 = vmatpush.msra.mxu0 %v457
    %536 = vmatpush.msra.mxu0 %v455
    %537 = vmatpush.msra.mxu0 %v453
    %538 = vmatpush.msra.mxu0 %v451
    %539 = vmatpush.msra.mxu0 %v449
    %540 = vmatpush.msra.mxu0 %v447
    %541 = vmatpush.msra.mxu0 %v445
    %542 = vmatpush.msra.mxu0 %v443
    %543 = vmatpush.msra.mxu0 %v441
    %544 = vmatpush.msra.mxu0 %v439
    %545 = vmatpush.msra.mxu0 %v437
    %546 = vmatpush.msra.mxu0 %v435
    %547 = vmatpush.msra.mxu0 %v433
    %548 = vmatpush.msra.mxu0 %v431
    %549 = vmatpush.msra.mxu0 %v429
    %550 = vmatmul.f32.gmra.mxu0 %v425
    %v551 = vpop.f32.mrf.mxu0
    %v552 = vadd.f32 %v493, %v551
    %553 = vdwg.mxu0
    %554 = vmatpush.msra.mxu0 %v491
    %555 = vmatpush.msra.mxu0 %v489
    %556 = vmatpush.msra.mxu0 %v487
    %557 = vmatpush.msra.mxu0 %v485
    %558 = vmatpush.msra.mxu0 %v483
    %559 = vmatpush.msra.mxu0 %v481
    %560 = vmatpush.msra.mxu0 %v479
    %561 = vmatpush.msra.mxu0 %v477
    %562 = vmatpush.msra.mxu0 %v475
    %563 = vmatpush.msra.mxu0 %v473
    %564 = vmatpush.msra.mxu0 %v471
    %565 = vmatpush.msra.mxu0 %v469
    %566 = vmatpush.msra.mxu0 %v467
    %567 = vmatpush.msra.mxu0 %v465
    %568 = vmatpush.msra.mxu0 %v463
    %569 = vmatpush.msra.mxu0 %v461
    %570 = vmatmul.f32.gmra.mxu0 %v426
    %v571 = vpop.f32.mrf.mxu0
    %v572 = vadd.f32 %v552, %v571
    %573 = vdwg.mxu0
    %v574 = vmax.f32 %v532, 0.0
    %v575 = vmax.f32 %v572, 0.0
    %v576 = vld [vmem:[#allocation9] sm:$0xff]
    %v577 = vld [vmem:[#allocation9 + $0x8] sm:$0xff]
    %v578 = vld [vmem:[#allocation9 + $0x10] sm:$0xff]
    %v579 = vld [vmem:[#allocation9 + $0x18] sm:$0xff]
    %v580 = vld [vmem:[#allocation9 + $0x20] sm:$0xff]
    %v581 = vld [vmem:[#allocation9 + $0x28] sm:$0xff]
    %v582 = vld [vmem:[#allocation9 + $0x30] sm:$0xff]
    %v583 = vld [vmem:[#allocation9 + $0x38] sm:$0xff]
    %v584 = vld [vmem:[#allocation9 + $0x40] sm:$0xff]
    %v585 = vld [vmem:[#allocation9 + $0x48] sm:$0xff]
    %v586 = vld [vmem:[#allocation9 + $0x50] sm:$0xff]
    %v587 = vld [vmem:[#allocation9 + $0x58] sm:$0xff]
    %v588 = vld [vmem:[#allocation9 + $0x60] sm:$0xff]
    %v589 = vld [vmem:[#allocation9 + $0x68] sm:$0xff]
    %v590 = vld [vmem:[#allocation9 + $0x70] sm:$0xff]
    %v591 = vld [vmem:[#allocation9 + $0x78] sm:$0xff]
    %v592 = vld [vmem:[#allocation9 + $0x80] sm:$0xff]
    %v593 = vld [vmem:[#allocation9 + $0x88] sm:$0xff]
    %v594 = vld [vmem:[#allocation9 + $0x90] sm:$0xff]
    %v595 = vld [vmem:[#allocation9 + $0x98] sm:$0xff]
    %v596 = vld [vmem:[#allocation9 + $0xa0] sm:$0xff]
    %v597 = vld [vmem:[#allocation9 + $0xa8] sm:$0xff]
    %v598 = vld [vmem:[#allocation9 + $0xb0] sm:$0xff]
    %v599 = vld [vmem:[#allocation9 + $0xb8] sm:$0xff]
    %v600 = vld [vmem:[#allocation9 + $0xc0] sm:$0xff]
    %v601 = vld [vmem:[#allocation9 + $0xc8] sm:$0xff]
    %v602 = vld [vmem:[#allocation9 + $0xd0] sm:$0xff]
    %v603 = vld [vmem:[#allocation9 + $0xd8] sm:$0xff]
    %v604 = vld [vmem:[#allocation9 + $0xe0] sm:$0xff]
    %v605 = vld [vmem:[#allocation9 + $0xe8] sm:$0xff]
    %v606 = vld [vmem:[#allocation9 + $0xf0] sm:$0xff]
    %v607 = vld [vmem:[#allocation9 + $0xf8] sm:$0xff]
    %v608 = vld [vmem:[#allocation9 + $0x100] sm:$0xff]
    %v609 = vld [vmem:[#allocation9 + $0x108] sm:$0xff]
    %v610 = vld [vmem:[#allocation9 + $0x110] sm:$0xff]
    %v611 = vld [vmem:[#allocation9 + $0x118] sm:$0xff]
    %v612 = vld [vmem:[#allocation9 + $0x120] sm:$0xff]
    %v613 = vld [vmem:[#allocation9 + $0x128] sm:$0xff]
    %v614 = vld [vmem:[#allocation9 + $0x130] sm:$0xff]
    %v615 = vld [vmem:[#allocation9 + $0x138] sm:$0xff]
    %v616 = vld [vmem:[#allocation9 + $0x140] sm:$0xff]
    %v617 = vld [vmem:[#allocation9 + $0x148] sm:$0xff]
    %v618 = vld [vmem:[#allocation9 + $0x150] sm:$0xff]
    %v619 = vld [vmem:[#allocation9 + $0x158] sm:$0xff]
    %v620 = vld [vmem:[#allocation9 + $0x160] sm:$0xff]
    %v621 = vld [vmem:[#allocation9 + $0x168] sm:$0xff]
    %v622 = vld [vmem:[#allocation9 + $0x170] sm:$0xff]
    %v623 = vld [vmem:[#allocation9 + $0x178] sm:$0xff]
    %v624 = vld [vmem:[#allocation9 + $0x180] sm:$0xff]
    %v625 = vld [vmem:[#allocation9 + $0x188] sm:$0xff]
    %v626 = vld [vmem:[#allocation9 + $0x190] sm:$0xff]
    %v627 = vld [vmem:[#allocation9 + $0x198] sm:$0xff]
    %v628 = vld [vmem:[#allocation9 + $0x1a0] sm:$0xff]
    %v629 = vld [vmem:[#allocation9 + $0x1a8] sm:$0xff]
    %v630 = vld [vmem:[#allocation9 + $0x1b0] sm:$0xff]
    %v631 = vld [vmem:[#allocation9 + $0x1b8] sm:$0xff]
    %v632 = vld [vmem:[#allocation9 + $0x1c0] sm:$0xff]
    %v633 = vld [vmem:[#allocation9 + $0x1c8] sm:$0xff]
    %v634 = vld [vmem:[#allocation9 + $0x1d0] sm:$0xff]
    %v635 = vld [vmem:[#allocation9 + $0x1d8] sm:$0xff]
    %v636 = vld [vmem:[#allocation9 + $0x1e0] sm:$0xff]
    %v637 = vld [vmem:[#allocation9 + $0x1e8] sm:$0xff]
    %v638 = vld [vmem:[#allocation9 + $0x1f0] sm:$0xff]
    %v639 = vld [vmem:[#allocation9 + $0x1f8] sm:$0xff]
    %v640 = vld [vmem:[%s4] sm:$0x3]
    %v642 = vperm.slane %v640, 0
    %v643 = vperm.slane %v640, 1
    %646 = vmatpush.msra.mxu0 %v606
    %647 = vmatpush.msra.mxu0 %v604
    %648 = vmatpush.msra.mxu0 %v602
    %649 = vmatpush.msra.mxu0 %v600
    %650 = vmatpush.msra.mxu0 %v598
    %651 = vmatpush.msra.mxu0 %v596
    %652 = vmatpush.msra.mxu0 %v594
    %653 = vmatpush.msra.mxu0 %v592
    %654 = vmatpush.msra.mxu0 %v590
    %655 = vmatpush.msra.mxu0 %v588
    %656 = vmatpush.msra.mxu0 %v586
    %657 = vmatpush.msra.mxu0 %v584
    %658 = vmatpush.msra.mxu0 %v582
    %659 = vmatpush.msra.mxu0 %v580
    %660 = vmatpush.msra.mxu0 %v578
    %661 = vmatpush.msra.mxu0 %v576
    %662 = vmatmul.f32.gmra.mxu0 %v574
    %v663 = vpop.f32.mrf.mxu0
    %v664 = vadd.f32 %v642, %v663
    %665 = vdwg.mxu0
    %666 = vmatpush.msra.mxu0 %v638
    %667 = vmatpush.msra.mxu0 %v636
    %668 = vmatpush.msra.mxu0 %v634
    %669 = vmatpush.msra.mxu0 %v632
    %670 = vmatpush.msra.mxu0 %v630
    %671 = vmatpush.msra.mxu0 %v628
    %672 = vmatpush.msra.mxu0 %v626
    %673 = vmatpush.msra.mxu0 %v624
    %674 = vmatpush.msra.mxu0 %v622
    %675 = vmatpush.msra.mxu0 %v620
    %676 = vmatpush.msra.mxu0 %v618
    %677 = vmatpush.msra.mxu0 %v616
    %678 = vmatpush.msra.mxu0 %v614
    %679 = vmatpush.msra.mxu0 %v612
    %680 = vmatpush.msra.mxu0 %v610
    %681 = vmatpush.msra.mxu0 %v608
    %682 = vmatmul.f32.gmra.mxu0 %v575
    %v683 = vpop.f32.mrf.mxu0
    %v684 = vadd.f32 %v664, %v683
    %685 = vdwg.mxu0
    %686 = vmatpush.msra.mxu0 %v607
    %687 = vmatpush.msra.mxu0 %v605
    %688 = vmatpush.msra.mxu0 %v603
    %689 = vmatpush.msra.mxu0 %v601
    %690 = vmatpush.msra.mxu0 %v599
    %691 = vmatpush.msra.mxu0 %v597
    %692 = vmatpush.msra.mxu0 %v595
    %693 = vmatpush.msra.mxu0 %v593
    %694 = vmatpush.msra.mxu0 %v591
    %695 = vmatpush.msra.mxu0 %v589
    %696 = vmatpush.msra.mxu0 %v587
    %697 = vmatpush.msra.mxu0 %v585
    %698 = vmatpush.msra.mxu0 %v583
    %699 = vmatpush.msra.mxu0 %v581
    %700 = vmatpush.msra.mxu0 %v579
    %701 = vmatpush.msra.mxu0 %v577
    %702 = vmatmul.f32.gmra.mxu0 %v574
    %v703 = vpop.f32.mrf.mxu0
    %v704 = vadd.f32 %v643, %v703
    %705 = vdwg.mxu0
    %706 = vmatpush.msra.mxu0 %v639
    %707 = vmatpush.msra.mxu0 %v637
    %708 = vmatpush.msra.mxu0 %v635
    %709 = vmatpush.msra.mxu0 %v633
    %710 = vmatpush.msra.mxu0 %v631
    %711 = vmatpush.msra.mxu0 %v629
    %712 = vmatpush.msra.mxu0 %v627
    %713 = vmatpush.msra.mxu0 %v625
    %714 = vmatpush.msra.mxu0 %v623
    %715 = vmatpush.msra.mxu0 %v621
    %716 = vmatpush.msra.mxu0 %v619
    %717 = vmatpush.msra.mxu0 %v617
    %718 = vmatpush.msra.mxu0 %v615
    %719 = vmatpush.msra.mxu0 %v613
    %720 = vmatpush.msra.mxu0 %v611
    %721 = vmatpush.msra.mxu0 %v609
    %722 = vmatmul.f32.gmra.mxu0 %v575
    %v723 = vpop.f32.mrf.mxu0
    %v724 = vadd.f32 %v704, %v723
    %725 = vdwg.mxu0
    %v726 = vmax.f32 %v684, 0.0
    %v727 = vmax.f32 %v724, 0.0
    %v728 = vld [vmem:[#allocation10] sm:$0xff]
    %v729 = vld [vmem:[#allocation10 + $0x8] sm:$0xff]
    %v730 = vld [vmem:[#allocation10 + $0x10] sm:$0xff]
    %v731 = vld [vmem:[#allocation10 + $0x18] sm:$0xff]
    %v732 = vld [vmem:[#allocation10 + $0x20] sm:$0xff]
    %v733 = vld [vmem:[#allocation10 + $0x28] sm:$0xff]
    %v734 = vld [vmem:[#allocation10 + $0x30] sm:$0xff]
    %v735 = vld [vmem:[#allocation10 + $0x38] sm:$0xff]
    %v736 = vld [vmem:[#allocation10 + $0x40] sm:$0xff]
    %v737 = vld [vmem:[#allocation10 + $0x48] sm:$0xff]
    %v738 = vld [vmem:[#allocation10 + $0x50] sm:$0xff]
    %v739 = vld [vmem:[#allocation10 + $0x58] sm:$0xff]
    %v740 = vld [vmem:[#allocation10 + $0x60] sm:$0xff]
    %v741 = vld [vmem:[#allocation10 + $0x68] sm:$0xff]
    %v742 = vld [vmem:[#allocation10 + $0x70] sm:$0xff]
    %v743 = vld [vmem:[#allocation10 + $0x78] sm:$0xff]
    %v744 = vld [vmem:[#allocation10 + $0x80] sm:$0xff]
    %v745 = vld [vmem:[#allocation10 + $0x88] sm:$0xff]
    %v746 = vld [vmem:[#allocation10 + $0x90] sm:$0xff]
    %v747 = vld [vmem:[#allocation10 + $0x98] sm:$0xff]
    %v748 = vld [vmem:[#allocation10 + $0xa0] sm:$0xff]
    %v749 = vld [vmem:[#allocation10 + $0xa8] sm:$0xff]
    %v750 = vld [vmem:[#allocation10 + $0xb0] sm:$0xff]
    %v751 = vld [vmem:[#allocation10 + $0xb8] sm:$0xff]
    %v752 = vld [vmem:[#allocation10 + $0xc0] sm:$0xff]
    %v753 = vld [vmem:[#allocation10 + $0xc8] sm:$0xff]
    %v754 = vld [vmem:[#allocation10 + $0xd0] sm:$0xff]
    %v755 = vld [vmem:[#allocation10 + $0xd8] sm:$0xff]
    %v756 = vld [vmem:[#allocation10 + $0xe0] sm:$0xff]
    %v757 = vld [vmem:[#allocation10 + $0xe8] sm:$0xff]
    %v758 = vld [vmem:[#allocation10 + $0xf0] sm:$0xff]
    %v759 = vld [vmem:[#allocation10 + $0xf8] sm:$0xff]
    %v760 = vld [vmem:[#allocation10 + $0x100] sm:$0xff]
    %v761 = vld [vmem:[#allocation10 + $0x108] sm:$0xff]
    %v762 = vld [vmem:[#allocation10 + $0x110] sm:$0xff]
    %v763 = vld [vmem:[#allocation10 + $0x118] sm:$0xff]
    %v764 = vld [vmem:[#allocation10 + $0x120] sm:$0xff]
    %v765 = vld [vmem:[#allocation10 + $0x128] sm:$0xff]
    %v766 = vld [vmem:[#allocation10 + $0x130] sm:$0xff]
    %v767 = vld [vmem:[#allocation10 + $0x138] sm:$0xff]
    %v768 = vld [vmem:[#allocation10 + $0x140] sm:$0xff]
    %v769 = vld [vmem:[#allocation10 + $0x148] sm:$0xff]
    %v770 = vld [vmem:[#allocation10 + $0x150] sm:$0xff]
    %v771 = vld [vmem:[#allocation10 + $0x158] sm:$0xff]
    %v772 = vld [vmem:[#allocation10 + $0x160] sm:$0xff]
    %v773 = vld [vmem:[#allocation10 + $0x168] sm:$0xff]
    %v774 = vld [vmem:[#allocation10 + $0x170] sm:$0xff]
    %v775 = vld [vmem:[#allocation10 + $0x178] sm:$0xff]
    %v776 = vld [vmem:[#allocation10 + $0x180] sm:$0xff]
    %v777 = vld [vmem:[#allocation10 + $0x188] sm:$0xff]
    %v778 = vld [vmem:[#allocation10 + $0x190] sm:$0xff]
    %v779 = vld [vmem:[#allocation10 + $0x198] sm:$0xff]
    %v780 = vld [vmem:[#allocation10 + $0x1a0] sm:$0xff]
    %v781 = vld [vmem:[#allocation10 + $0x1a8] sm:$0xff]
    %v782 = vld [vmem:[#allocation10 + $0x1b0] sm:$0xff]
    %v783 = vld [vmem:[#allocation10 + $0x1b8] sm:$0xff]
    %v784 = vld [vmem:[#allocation10 + $0x1c0] sm:$0xff]
    %v785 = vld [vmem:[#allocation10 + $0x1c8] sm:$0xff]
    %v786 = vld [vmem:[#allocation10 + $0x1d0] sm:$0xff]
    %v787 = vld [vmem:[#allocation10 + $0x1d8] sm:$0xff]
    %v788 = vld [vmem:[#allocation10 + $0x1e0] sm:$0xff]
    %v789 = vld [vmem:[#allocation10 + $0x1e8] sm:$0xff]
    %v790 = vld [vmem:[#allocation10 + $0x1f0] sm:$0xff]
    %v791 = vld [vmem:[#allocation10 + $0x1f8] sm:$0xff]
    %v792 = vld [vmem:[%s6] sm:$0x3]
    %v794 = vperm.slane %v792, 0
    %v795 = vperm.slane %v792, 1
    %798 = vmatpush.msra.mxu0 %v758
    %799 = vmatpush.msra.mxu0 %v756
    %800 = vmatpush.msra.mxu0 %v754
    %801 = vmatpush.msra.mxu0 %v752
    %802 = vmatpush.msra.mxu0 %v750
    %803 = vmatpush.msra.mxu0 %v748
    %804 = vmatpush.msra.mxu0 %v746
    %805 = vmatpush.msra.mxu0 %v744
    %806 = vmatpush.msra.mxu0 %v742
    %807 = vmatpush.msra.mxu0 %v740
    %808 = vmatpush.msra.mxu0 %v738
    %809 = vmatpush.msra.mxu0 %v736
    %810 = vmatpush.msra.mxu0 %v734
    %811 = vmatpush.msra.mxu0 %v732
    %812 = vmatpush.msra.mxu0 %v730
    %813 = vmatpush.msra.mxu0 %v728
    %814 = vmatmul.f32.gmra.mxu0 %v726
    %v815 = vpop.f32.mrf.mxu0
    %v816 = vadd.f32 %v794, %v815
    %817 = vdwg.mxu0
    %818 = vmatpush.msra.mxu0 %v790
    %819 = vmatpush.msra.mxu0 %v788
    %820 = vmatpush.msra.mxu0 %v786
    %821 = vmatpush.msra.mxu0 %v784
    %822 = vmatpush.msra.mxu0 %v782
    %823 = vmatpush.msra.mxu0 %v780
    %824 = vmatpush.msra.mxu0 %v778
    %825 = vmatpush.msra.mxu0 %v776
    %826 = vmatpush.msra.mxu0 %v774
    %827 = vmatpush.msra.mxu0 %v772
    %828 = vmatpush.msra.mxu0 %v770
    %829 = vmatpush.msra.mxu0 %v768
    %830 = vmatpush.msra.mxu0 %v766
    %831 = vmatpush.msra.mxu0 %v764
    %832 = vmatpush.msra.mxu0 %v762
    %833 = vmatpush.msra.mxu0 %v760
    %834 = vmatmul.f32.gmra.mxu0 %v727
    %v835 = vpop.f32.mrf.mxu0
    %v836 = vadd.f32 %v816, %v835
    %837 = vdwg.mxu0
    %838 = vmatpush.msra.mxu0 %v759
    %839 = vmatpush.msra.mxu0 %v757
    %840 = vmatpush.msra.mxu0 %v755
    %841 = vmatpush.msra.mxu0 %v753
    %842 = vmatpush.msra.mxu0 %v751
    %843 = vmatpush.msra.mxu0 %v749
    %844 = vmatpush.msra.mxu0 %v747
    %845 = vmatpush.msra.mxu0 %v745
    %846 = vmatpush.msra.mxu0 %v743
    %847 = vmatpush.msra.mxu0 %v741
    %848 = vmatpush.msra.mxu0 %v739
    %849 = vmatpush.msra.mxu0 %v737
    %850 = vmatpush.msra.mxu0 %v735
    %851 = vmatpush.msra.mxu0 %v733
    %852 = vmatpush.msra.mxu0 %v731
    %853 = vmatpush.msra.mxu0 %v729
    %854 = vmatmul.f32.gmra.mxu0 %v726
    %v855 = vpop.f32.mrf.mxu0
    %v856 = vadd.f32 %v795, %v855
    %857 = vdwg.mxu0
    %858 = vmatpush.msra.mxu0 %v791
    %859 = vmatpush.msra.mxu0 %v789
    %860 = vmatpush.msra.mxu0 %v787
    %861 = vmatpush.msra.mxu0 %v785
    %862 = vmatpush.msra.mxu0 %v783
    %863 = vmatpush.msra.mxu0 %v781
    %864 = vmatpush.msra.mxu0 %v779
    %865 = vmatpush.msra.mxu0 %v777
    %866 = vmatpush.msra.mxu0 %v775
    %867 = vmatpush.msra.mxu0 %v773
    %868 = vmatpush.msra.mxu0 %v771
    %869 = vmatpush.msra.mxu0 %v769
    %870 = vmatpush.msra.mxu0 %v767
    %871 = vmatpush.msra.mxu0 %v765
    %872 = vmatpush.msra.mxu0 %v763
    %873 = vmatpush.msra.mxu0 %v761
    %874 = vmatmul.f32.gmra.mxu0 %v727
    %v875 = vpop.f32.mrf.mxu0
    %v876 = vadd.f32 %v856, %v875
    %877 = vdwg.mxu0
    %v878 = vmax.f32 %v836, 0.0
    %v879 = vmax.f32 %v876, 0.0
    %v880 = vld [vmem:[#allocation12] sm:$0xff]
    %v881 = vld [vmem:[#allocation12 + $0x8] sm:$0xff]
    %v882 = vld [vmem:[#allocation12 + $0x10] sm:$0xff]
    %v883 = vld [vmem:[#allocation12 + $0x18] sm:$0xff]
    %v884 = vld [vmem:[#allocation12 + $0x20] sm:$0xff]
    %v885 = vld [vmem:[#allocation12 + $0x28] sm:$0xff]
    %v886 = vld [vmem:[#allocation12 + $0x30] sm:$0xff]
    %v887 = vld [vmem:[#allocation12 + $0x38] sm:$0xff]
    %v888 = vld [vmem:[#allocation12 + $0x40] sm:$0xff]
    %v889 = vld [vmem:[#allocation12 + $0x48] sm:$0xff]
    %v890 = vld [vmem:[#allocation12 + $0x50] sm:$0xff]
    %v891 = vld [vmem:[#allocation12 + $0x58] sm:$0xff]
    %v892 = vld [vmem:[#allocation12 + $0x60] sm:$0xff]
    %v893 = vld [vmem:[#allocation12 + $0x68] sm:$0xff]
    %v894 = vld [vmem:[#allocation12 + $0x70] sm:$0xff]
    %v895 = vld [vmem:[#allocation12 + $0x78] sm:$0xff]
    %v896 = vld [vmem:[#allocation12 + $0x80] sm:$0xff]
    %v897 = vld [vmem:[#allocation12 + $0x88] sm:$0xff]
    %v898 = vld [vmem:[#allocation12 + $0x90] sm:$0xff]
    %v899 = vld [vmem:[#allocation12 + $0x98] sm:$0xff]
    %v900 = vld [vmem:[#allocation12 + $0xa0] sm:$0xff]
    %v901 = vld [vmem:[#allocation12 + $0xa8] sm:$0xff]
    %v902 = vld [vmem:[#allocation12 + $0xb0] sm:$0xff]
    %v903 = vld [vmem:[#allocation12 + $0xb8] sm:$0xff]
    %v904 = vld [vmem:[#allocation12 + $0xc0] sm:$0xff]
    %v905 = vld [vmem:[#allocation12 + $0xc8] sm:$0xff]
    %v906 = vld [vmem:[#allocation12 + $0xd0] sm:$0xff]
    %v907 = vld [vmem:[#allocation12 + $0xd8] sm:$0xff]
    %v908 = vld [vmem:[#allocation12 + $0xe0] sm:$0xff]
    %v909 = vld [vmem:[#allocation12 + $0xe8] sm:$0xff]
    %v910 = vld [vmem:[#allocation12 + $0xf0] sm:$0xff]
    %v911 = vld [vmem:[#allocation12 + $0xf8] sm:$0xff]
    %v912 = vld [vmem:[#allocation12 + $0x100] sm:$0xff]
    %v913 = vld [vmem:[#allocation12 + $0x108] sm:$0xff]
    %v914 = vld [vmem:[#allocation12 + $0x110] sm:$0xff]
    %v915 = vld [vmem:[#allocation12 + $0x118] sm:$0xff]
    %v916 = vld [vmem:[#allocation12 + $0x120] sm:$0xff]
    %v917 = vld [vmem:[#allocation12 + $0x128] sm:$0xff]
    %v918 = vld [vmem:[#allocation12 + $0x130] sm:$0xff]
    %v919 = vld [vmem:[#allocation12 + $0x138] sm:$0xff]
    %v920 = vld [vmem:[#allocation12 + $0x140] sm:$0xff]
    %v921 = vld [vmem:[#allocation12 + $0x148] sm:$0xff]
    %v922 = vld [vmem:[#allocation12 + $0x150] sm:$0xff]
    %v923 = vld [vmem:[#allocation12 + $0x158] sm:$0xff]
    %v924 = vld [vmem:[#allocation12 + $0x160] sm:$0xff]
    %v925 = vld [vmem:[#allocation12 + $0x168] sm:$0xff]
    %v926 = vld [vmem:[#allocation12 + $0x170] sm:$0xff]
    %v927 = vld [vmem:[#allocation12 + $0x178] sm:$0xff]
    %v928 = vld [vmem:[#allocation12 + $0x180] sm:$0xff]
    %v929 = vld [vmem:[#allocation12 + $0x188] sm:$0xff]
    %v930 = vld [vmem:[#allocation12 + $0x190] sm:$0xff]
    %v931 = vld [vmem:[#allocation12 + $0x198] sm:$0xff]
    %v932 = vld [vmem:[#allocation12 + $0x1a0] sm:$0xff]
    %v933 = vld [vmem:[#allocation12 + $0x1a8] sm:$0xff]
    %v934 = vld [vmem:[#allocation12 + $0x1b0] sm:$0xff]
    %v935 = vld [vmem:[#allocation12 + $0x1b8] sm:$0xff]
    %v936 = vld [vmem:[#allocation12 + $0x1c0] sm:$0xff]
    %v937 = vld [vmem:[#allocation12 + $0x1c8] sm:$0xff]
    %v938 = vld [vmem:[#allocation12 + $0x1d0] sm:$0xff]
    %v939 = vld [vmem:[#allocation12 + $0x1d8] sm:$0xff]
    %v940 = vld [vmem:[#allocation12 + $0x1e0] sm:$0xff]
    %v941 = vld [vmem:[#allocation12 + $0x1e8] sm:$0xff]
    %v942 = vld [vmem:[#allocation12 + $0x1f0] sm:$0xff]
    %v943 = vld [vmem:[#allocation12 + $0x1f8] sm:$0xff]
    %v944 = vld [vmem:[%s8] sm:$0x3]
    %v946 = vperm.slane %v944, 0
    %v947 = vperm.slane %v944, 1
    %950 = vmatpush.msra.mxu0 %v910
    %951 = vmatpush.msra.mxu0 %v908
    %952 = vmatpush.msra.mxu0 %v906
    %953 = vmatpush.msra.mxu0 %v904
    %954 = vmatpush.msra.mxu0 %v902
    %955 = vmatpush.msra.mxu0 %v900
    %956 = vmatpush.msra.mxu0 %v898
    %957 = vmatpush.msra.mxu0 %v896
    %958 = vmatpush.msra.mxu0 %v894
    %959 = vmatpush.msra.mxu0 %v892
    %960 = vmatpush.msra.mxu0 %v890
    %961 = vmatpush.msra.mxu0 %v888
    %962 = vmatpush.msra.mxu0 %v886
    %963 = vmatpush.msra.mxu0 %v884
    %964 = vmatpush.msra.mxu0 %v882
    %965 = vmatpush.msra.mxu0 %v880
    %966 = vmatmul.f32.gmra.mxu0 %v878
    %v967 = vpop.f32.mrf.mxu0
    %v968 = vadd.f32 %v946, %v967
    %969 = vdwg.mxu0
    %970 = vmatpush.msra.mxu0 %v942
    %971 = vmatpush.msra.mxu0 %v940
    %972 = vmatpush.msra.mxu0 %v938
    %973 = vmatpush.msra.mxu0 %v936
    %974 = vmatpush.msra.mxu0 %v934
    %975 = vmatpush.msra.mxu0 %v932
    %976 = vmatpush.msra.mxu0 %v930
    %977 = vmatpush.msra.mxu0 %v928
    %978 = vmatpush.msra.mxu0 %v926
    %979 = vmatpush.msra.mxu0 %v924
    %980 = vmatpush.msra.mxu0 %v922
    %981 = vmatpush.msra.mxu0 %v920
    %982 = vmatpush.msra.mxu0 %v918
    %983 = vmatpush.msra.mxu0 %v916
    %984 = vmatpush.msra.mxu0 %v914
    %985 = vmatpush.msra.mxu0 %v912
    %986 = vmatmul.f32.gmra.mxu0 %v879
    %v987 = vpop.f32.mrf.mxu0
    %v988 = vadd.f32 %v968, %v987
    %989 = vdwg.mxu0
    %990 = vmatpush.msra.mxu0 %v911
    %991 = vmatpush.msra.mxu0 %v909
    %992 = vmatpush.msra.mxu0 %v907
    %993 = vmatpush.msra.mxu0 %v905
    %994 = vmatpush.msra.mxu0 %v903
    %995 = vmatpush.msra.mxu0 %v901
    %996 = vmatpush.msra.mxu0 %v899
    %997 = vmatpush.msra.mxu0 %v897
    %998 = vmatpush.msra.mxu0 %v895
    %999 = vmatpush.msra.mxu0 %v893
    %1000 = vmatpush.msra.mxu0 %v891
    %1001 = vmatpush.msra.mxu0 %v889
    %1002 = vmatpush.msra.mxu0 %v887
    %1003 = vmatpush.msra.mxu0 %v885
    %1004 = vmatpush.msra.mxu0 %v883
    %1005 = vmatpush.msra.mxu0 %v881
    %1006 = vmatmul.f32.gmra.mxu0 %v878
    %v1007 = vpop.f32.mrf.mxu0
    %v1008 = vadd.f32 %v947, %v1007
    %1009 = vdwg.mxu0
    %1010 = vmatpush.msra.mxu0 %v943
    %1011 = vmatpush.msra.mxu0 %v941
    %1012 = vmatpush.msra.mxu0 %v939
    %1013 = vmatpush.msra.mxu0 %v937
    %1014 = vmatpush.msra.mxu0 %v935
    %1015 = vmatpush.msra.mxu0 %v933
    %1016 = vmatpush.msra.mxu0 %v931
    %1017 = vmatpush.msra.mxu0 %v929
    %1018 = vmatpush.msra.mxu0 %v927
    %1019 = vmatpush.msra.mxu0 %v925
    %1020 = vmatpush.msra.mxu0 %v923
    %1021 = vmatpush.msra.mxu0 %v921
    %1022 = vmatpush.msra.mxu0 %v919
    %1023 = vmatpush.msra.mxu0 %v917
    %1024 = vmatpush.msra.mxu0 %v915
    %1025 = vmatpush.msra.mxu0 %v913
    %1026 = vmatmul.f32.gmra.mxu0 %v879
    %v1027 = vpop.f32.mrf.mxu0
    %v1028 = vadd.f32 %v1008, %v1027
    %1029 = vdwg.mxu0
    %v1030 = vmax.f32 %v988, 0.0
    %v1031 = vmax.f32 %v1028, 0.0
    %v1032 = vld [vmem:[%s9] sm:$0x3]
    %v1034 = vperm.slane %v1032, 0
    %v1035 = vperm.slane %v1032, 1
    %v1038 = vmul.f32 %v1030, %v1034
    %v1039 = vmul.f32 %v1031, %v1035
    %v1040 = vadd.f32 %v1038, %v1039
    %1041 = vadd.xlane.f32.xlu0 %v1040
    %v1042 = vpop.xlane.xlu0 %1041
    %s1043 = sld [smem:[#allocation2]]
    %v1044 = vstv %s1043
    %v1045 = vadd.f32 %v1042, %v1044
    %vm1046 = vcmask 7168
    %1047 = vst.msk [vmem:[%s11] sm:$0xff] %vm1046, %v1045
    // Predicated region
    $region70: #{tpu_custom_call.1} parent=1 // pred_check
      _
    $region71: #{tpu_custom_call.1} parent=1 // pred_check_branch
      %1049 = sbr.rel (0) target = $region73
    $region72: #{tpu_custom_call.1} parent=1 // pred_region
      _
    $region73: #{tpu_custom_call.1} parent=1 // pred_fallthru
      _
    // Predicated region
    $region74: #{tpu_custom_call.1} parent=1 // pred_check
      _
    $region75: #{tpu_custom_call.1} parent=1 // pred_check_branch
      %1051 = sbr.rel (0) target = $region77
    $region76: #{tpu_custom_call.1} parent=1 // pred_region
      _
    $region77: #{tpu_custom_call.1} parent=1 // pred_fallthru
      _
    %1052 = vsyncpa [#allocation4], 1
    %1053 = vsyncpa [#allocation7], 1
    %1054 = vsyncpa [#allocation11], 1
    %1055 = vsyncpa [#allocation5], 1

</llo_original>
